<compile_context>
chip_gen: v5e
topology: v5e:2x2
jax: 0.10.0
libtpu: 0.0.40
codegen_flags: <defaults>
</compile_context>

<pallas_src>
import functools
import math

import jax
import jax.numpy as jnp
from jax.experimental import pallas as pl
from jax.experimental.pallas import tpu as pltpu

_TARGET_TILE_BYTES = 2 << 20     # ~2 MiB per input buffer (f32 accounting)
_MIN_PALLAS_ELEMS = 64 * 1024    # below this, fused XLA beats kernel launch cost
_MIN_LANE = 128                  # need a lane-dense last dim for good vst/DMA


def _round_up(x, m):
    return -(-x // m) * m


def _contrastive_loss_kernel(y_ref, dw_ref, o_ref, *, alpha, beta, margin):
    # Cast in-kernel (keeps HBM-side arrays in their original dtype); compute f32.
    y = y_ref[...].astype(jnp.float32)
    dw = dw_ref[...].astype(jnp.float32)
    hinge = jnp.maximum(margin - dw, 0.0)
    h2 = beta * (hinge * hinge)
    # alpha*y*dw^2 + (1-y)*beta*hinge^2  ==  y*(alpha*dw^2 - h2) + h2
    o_ref[...] = (y * (alpha * (dw * dw) - h2) + h2).astype(o_ref.dtype)


def contrastive_loss_ref(y, dw, *, alpha, beta, margin):
    """Plain-JAX reference mirroring the PyTorch forward (f32 intermediates)."""
    out_dtype = jnp.result_type(y.dtype, dw.dtype)
    yf = y.astype(jnp.float32)
    dwf = dw.astype(jnp.float32)
    hinge = jnp.maximum(margin - dwf, 0.0)
    out = alpha * yf * dwf * dwf + (1.0 - yf) * beta * hinge * hinge
    return out.astype(out_dtype)


def _pick_2d_layout(shape):
    """Zero-copy [rows, lane] view via leading-dim collapse, or None."""
    if not shape:
        return None
    lane = shape[-1]
    rows = math.prod(shape[:-1]) if len(shape) > 1 else 1
    if rows == 0 or lane == 0:
        return None
    # Need a lane-dense last dim, and one row must fit the per-buffer budget.
    if lane >= _MIN_LANE and lane * 4 <= _TARGET_TILE_BYTES:
        return rows, lane
    return None


def contrastive_loss(y, dw, *, alpha, beta, margin):
    """Elementwise contrastive loss; y, dw same shape -> same-shape output."""
    assert y.shape == dw.shape, "y and dw must have the same shape"
    orig_shape = y.shape
    total = math.prod(orig_shape) if orig_shape else 1
    out_dtype = jnp.result_type(y.dtype, dw.dtype)

    layout = _pick_2d_layout(orig_shape) if total >= _MIN_PALLAS_ELEMS else None
    if layout is None:
        # Tiny problems, or shapes with no zero-copy lane-dense 2D view:
        # the fused XLA expression is at the HBM roofline and avoids any
        # relayout / padding copies a forced re-tiling would introduce.
        return contrastive_loss_ref(y, dw, alpha=alpha, beta=beta, margin=margin)

    rows, lane = layout
    y2 = y.reshape(rows, lane)      # leading-dim collapse: no data movement
    dw2 = dw.reshape(rows, lane)

    # Sublane granularity so narrow dtypes (bf16 / int8 / bool) stay packed.
    min_itemsize = min(jnp.dtype(y.dtype).itemsize,
                       jnp.dtype(dw.dtype).itemsize,
                       jnp.dtype(out_dtype).itemsize)
    sublane_mult = max(8, 32 // max(int(min_itemsize), 1))

    # Tile rows: big enough (~2 MiB/buffer) to amortize ~0.35us/step pipeline
    # overhead, but forced to >= ~4 grid steps when rows allow so the
    # "parallel" axis shards across both v7x TensorCores.
    rows_budget = max(sublane_mult,
                      (_TARGET_TILE_BYTES // (lane * 4)) // sublane_mult * sublane_mult)
    rows_quarter = _round_up(pl.cdiv(rows, 4), sublane_mult)
    tile_rows = min(rows_budget, rows_quarter)
    if tile_rows >= rows:
        tile_rows = rows            # block == full dims is always legal
    grid = (pl.cdiv(rows, tile_rows),)   # ragged last block: OOB writes dropped

    kernel = functools.partial(
        _contrastive_loss_kernel,
        alpha=float(alpha), beta=float(beta), margin=float(margin))

    spec = pl.BlockSpec((tile_rows, lane), lambda i: (i, 0))
    bytes_accessed = total * (jnp.dtype(y.dtype).itemsize
                              + jnp.dtype(dw.dtype).itemsize
                              + jnp.dtype(out_dtype).itemsize)

    out2 = pl.pallas_call(
        kernel,
        out_shape=jax.ShapeDtypeStruct((rows, lane), out_dtype),
        grid=grid,
        in_specs=[spec, spec],
        out_specs=spec,
        compiler_params=pltpu.CompilerParams(
            dimension_semantics=("parallel",)),
        cost_estimate=pl.CostEstimate(
            flops=9 * total, transcendentals=0, bytes_accessed=bytes_accessed),
    )(y2, dw2)

    return out2.reshape(orig_shape)   # zero-copy: no padding was introduced


if __name__ == "__main__":
    # Deterministic "module params" (ContrastiveLoss.__init__ args).
    alpha, beta, margin = 0.5, 0.5, 2.0

    key = jax.random.PRNGKey(0)
    k1, k2, k3, k4, k5, k6 = jax.random.split(key, 6)

    # (a) Collapsed-2D path: last dim 500 (not a multiple of 128 -> block last
    #     dim == full dim) with a ragged row grid (300 rows, 80-row tiles, 4 steps).
    B, N = 300, 500
    y = jax.random.bernoulli(k1, p=0.5, shape=(B, N)).astype(jnp.float32)
    dw = jax.random.uniform(k2, (B, N), dtype=jnp.float32, minval=0.0, maxval=4.0)
    out = jax.block_until_ready(
        contrastive_loss(y, dw, alpha=alpha, beta=beta, margin=margin))
    ref = contrastive_loss_ref(y, dw, alpha=alpha, beta=beta, margin=margin)
    assert out.shape == (B, N) and out.dtype == jnp.float32
    assert jnp.allclose(out, ref, atol=1e-5, rtol=1e-5), "mismatch vs reference (a)"

    # (b) Lane-dense path: last dim 1024, multi-step parallel grid.
    y = jax.random.bernoulli(k3, p=0.5, shape=(128, 1024)).astype(jnp.float32)
    dw = jax.random.uniform(k4, (128, 1024), dtype=jnp.float32, minval=0.0, maxval=4.0)
    out = jax.block_until_ready(
        contrastive_loss(y, dw, alpha=alpha, beta=beta, margin=margin))
    ref = contrastive_loss_ref(y, dw, alpha=alpha, beta=beta, margin=margin)
    assert out.shape == (128, 1024)
    assert jnp.allclose(out, ref, atol=1e-5, rtol=1e-5), "mismatch vs reference (b)"

    # (c) Tiny shape takes the fused-XLA fallback path.
    ys = jax.random.bernoulli(k5, p=0.5, shape=(8, 128)).astype(jnp.float32)
    dws = jax.random.uniform(k6, (8, 128), dtype=jnp.float32, minval=0.0, maxval=4.0)
    outs = jax.block_until_ready(
        contrastive_loss(ys, dws, alpha=alpha, beta=beta, margin=margin))
    refs = contrastive_loss_ref(ys, dws, alpha=alpha, beta=beta, margin=margin)
    assert outs.shape == (8, 128)
    assert jnp.allclose(outs, refs, atol=1e-5, rtol=1e-5), "fallback mismatch"

    print("KERNEL_OK")
</pallas_src>

<mosaic_0001>
module attributes {stable_mosaic.version = 11 : i64} {
  func.func @_contrastive_loss_kernel(%arg0: i32, %arg1: memref<80x500xf32, #tpu.memory_space<vmem>>, %arg2: memref<80x500xf32, #tpu.memory_space<vmem>>, %arg3: memref<80x500xf32, #tpu.memory_space<vmem>>) attributes {dimension_semantics = [#tpu.dimension_semantics<parallel>], iteration_bounds = array<i64: 4>, scalar_prefetch = 0 : i64, scratch_operands = 0 : i64, tpu.core_type = #tpu.core_type<tc>, window_params = [{transform_indices = @transform_0, window_bounds = array<i64: 80, 500>}, {transform_indices = @transform_1, window_bounds = array<i64: 80, 500>}, {transform_indices = @transform_2, window_bounds = array<i64: 80, 500>}]} {
    %c0 = arith.constant 0 : index
    %c0_0 = arith.constant 0 : index
    %0 = vector.load %arg1[%c0, %c0_0] : memref<80x500xf32, #tpu.memory_space<vmem>>, vector<80x500xf32>
    %c0_1 = arith.constant 0 : index
    %c0_2 = arith.constant 0 : index
    %1 = vector.load %arg2[%c0_1, %c0_2] : memref<80x500xf32, #tpu.memory_space<vmem>>, vector<80x500xf32>
    %cst = arith.constant 2.000000e+00 : f32
    %2 = vector.broadcast %cst : f32 to vector<80x500xf32>
    %3 = arith.subf %2, %1 : vector<80x500xf32>
    %cst_3 = arith.constant 0.000000e+00 : f32
    %4 = vector.broadcast %cst_3 : f32 to vector<80x500xf32>
    %5 = arith.maximumf %3, %4 : vector<80x500xf32>
    %6 = arith.mulf %5, %5 : vector<80x500xf32>
    %cst_4 = arith.constant 5.000000e-01 : f32
    %7 = vector.broadcast %cst_4 : f32 to vector<80x500xf32>
    %8 = arith.mulf %7, %6 : vector<80x500xf32>
    %9 = arith.mulf %1, %1 : vector<80x500xf32>
    %cst_5 = arith.constant 5.000000e-01 : f32
    %10 = vector.broadcast %cst_5 : f32 to vector<80x500xf32>
    %11 = arith.mulf %10, %9 : vector<80x500xf32>
    %12 = arith.subf %11, %8 : vector<80x500xf32>
    %13 = arith.mulf %0, %12 : vector<80x500xf32>
    %14 = arith.addf %13, %8 : vector<80x500xf32>
    %c0_6 = arith.constant 0 : index
    %c0_7 = arith.constant 0 : index
    %15 = vector.load %arg3[%c0_6, %c0_7] : memref<80x500xf32, #tpu.memory_space<vmem>>, vector<80x500xf32>
    tpu.vector_store %arg3[%c0_6, %c0_7], %14 {strides = array<i32>} : memref<80x500xf32, #tpu.memory_space<vmem>>, vector<80x500xf32>,
    return
  }
  func.func @transform_0(%arg0: i32) -> (i32, i32) {
    %c0_i32 = arith.constant 0 : i32
    %c0_i32_0 = arith.constant 0 : i32
    return %arg0, %c0_i32 : i32, i32
  }
  func.func @transform_1(%arg0: i32) -> (i32, i32) {
    %c0_i32 = arith.constant 0 : i32
    %c0_i32_0 = arith.constant 0 : i32
    return %arg0, %c0_i32 : i32, i32
  }
  func.func @transform_2(%arg0: i32) -> (i32, i32) {
    %c0_i32 = arith.constant 0 : i32
    %c0_i32_0 = arith.constant 0 : i32
    return %arg0, %c0_i32 : i32, i32
  }
}

</mosaic_0001>

<llo_original>
// kernel: tpu_custom_call.1
$region0: #{tpu_custom_call.1}
  #allocation0 [shape = 'u32[]', space=smem, size = 0x4, offset = 0x4, fixed_abs, tag = 'smem constant byte address 0x4 - core index']
  #allocation1 [shape = 'u32[72,128]{1,0:T(1,128)}', space=vmem, size = 0x9000, scoped, tag = 'internal scratch']
  %s0 = inlined_call_operand.hbm [shape: f32[300,500], index: 0, kind: input, shape index: {}]
  %s1 = inlined_call_operand.hbm [shape: f32[300,500], index: 1, kind: input, shape index: {}]
  %s2 = inlined_call_operand.hbm [shape: f32[300,500], index: 2, kind: output, shape index: {}]
  %s3 = sld [smem:[#allocation0]]
  $region49: #{tpu_custom_call.1} parent=0
    _
  %s5 = ssub.s32 1, %s3
  %s6 = scalar_select 0, %s5, %s3
  $region1: #{tpu_custom_call.1} parent=0
    #allocation2 [shape = 'u8[327680]{0}', space=vmem, size = 0x50000, scoped, tag = 'input window, operand 0']
    #allocation3 [shape = 's32[2]{0}', space=sflag, size = 0x8, scoped, tag = 'scoped memory for tpu_custom_call.1']
    #allocation4 [shape = 's32[2]{0}', space=sflag, size = 0x8, scoped, tag = 'scoped memory for tpu_custom_call.1']
    #allocation5 [shape = 'u8[327680]{0}', space=vmem, size = 0x50000, scoped, tag = 'input window, operand 1']
    #allocation6 [shape = 's32[2]{0}', space=sflag, size = 0x8, scoped, tag = 'scoped memory for tpu_custom_call.1']
    #allocation7 [shape = 'u8[327680]{0}', space=vmem, size = 0x50000, scoped, tag = 'output window, operand 0']
    %7 = vsyncpa [#allocation3], 0
    %s8 = scalar_lea.sflag [#allocation3], 1
    %9 = vsyncpa %s8, 0
    %10 = vsyncpa [#allocation6], 0
    %s11 = scalar_lea.sflag [#allocation6], 1
    %12 = vsyncpa %s11, 0
    %13 = vsyncpa [#allocation4], 0
    %s14 = scalar_lea.sflag [#allocation4], 1
    %15 = vsyncpa %s14, 0
    loop: start=0, step=1, limit=6
    $region2: #{tpu_custom_call.1} parent=1 // loop_pre_header
      _
    $region3: #{tpu_custom_call.1} parent=1 // loop_header
      %s17 = sphi 0, %s21
      %p18 = scmp.ge.s32.totalorder %s17, 6
      %s27 = sphi 0, %s29
      %s30 = sphi 0, %s27
      %s31 = sphi 0, %s30
      %s47 = sphi 0, %s31
      %s53 = sphi 0, %s55
      %s56 = sphi 0, %s53
      %s57 = sphi 0, %s56
      %s73 = sphi 0, %s57
      %s79 = sphi 0, %s81
      %s82 = sphi 0, %s79
      %s83 = sphi 0, %s82
      %s99 = sphi 0, %s83
    $region4: #{tpu_custom_call.1} parent=1 // loop_header_branch
      %20 = sbr.rel (%p18) target = $region8
    $region5: #{tpu_custom_call.1} parent=1 // loop_body
      %s22 = ssub.s32 %s17, 1
      %s23 = ssub.s32 %s17, 2
      %s24 = sadd.s32 %s17, 1
      %s25 = ssub.s32 %s17, %s24
      %p26 = scmp.eq.s32.totalorder %s25, 0
      %s28 = sadd.s32 %s27, 1
      %s29 = scalar_select %p26, %s27, %s28
      %p32 = pneg %p26
      %p33 = scmp.eq.s32.totalorder %s17, 3
      %p34 = por %p32, %p33
      %p35 = scmp.ne.s32.totalorder %s27, %s30
      %p36 = scmp.eq.s32.totalorder %s17, 0
      %p37 = por %p35, %p36
      %p38 = scmp.ne.s32.totalorder %s27, %s30
      %p39 = scmp.eq.s32.totalorder %s22, 3
      %p40 = por %p38, %p39
      %p41 = scmp.ne.s32.totalorder %s30, %s31
      %p42 = scmp.eq.s32.totalorder %s22, 0
      %p43 = por %p41, %p42
      %p44 = scmp.ne.s32.totalorder %s30, %s31
      %p45 = scmp.eq.s32.totalorder %s23, 3
      %p46 = por %p44, %p45
      %p48 = scmp.ne.s32.totalorder %s31, %s47
      %p49 = scmp.eq.s32.totalorder %s23, 0
      %p50 = por %p48, %p49
      %s51 = ssub.s32 %s17, %s24
      %p52 = scmp.eq.s32.totalorder %s51, 0
      %s54 = sadd.s32 %s53, 1
      %s55 = scalar_select %p52, %s53, %s54
      %p58 = pneg %p52
      %p59 = scmp.eq.s32.totalorder %s17, 3
      %p60 = por %p58, %p59
      %p61 = scmp.ne.s32.totalorder %s53, %s56
      %p62 = scmp.eq.s32.totalorder %s17, 0
      %p63 = por %p61, %p62
      %p64 = scmp.ne.s32.totalorder %s53, %s56
      %p65 = scmp.eq.s32.totalorder %s22, 3
      %p66 = por %p64, %p65
      %p67 = scmp.ne.s32.totalorder %s56, %s57
      %p68 = scmp.eq.s32.totalorder %s22, 0
      %p69 = por %p67, %p68
      %p70 = scmp.ne.s32.totalorder %s56, %s57
      %p71 = scmp.eq.s32.totalorder %s23, 3
      %p72 = por %p70, %p71
      %p74 = scmp.ne.s32.totalorder %s57, %s73
      %p75 = scmp.eq.s32.totalorder %s23, 0
      %p76 = por %p74, %p75
      %s77 = ssub.s32 %s17, %s24
      %p78 = scmp.eq.s32.totalorder %s77, 0
      %s80 = sadd.s32 %s79, 1
      %s81 = scalar_select %p78, %s79, %s80
      %p84 = pneg %p78
      %p85 = scmp.eq.s32.totalorder %s17, 3
      %p86 = por %p84, %p85
      %p87 = scmp.ne.s32.totalorder %s79, %s82
      %p88 = scmp.eq.s32.totalorder %s17, 0
      %p89 = por %p87, %p88
      %p90 = scmp.ne.s32.totalorder %s79, %s82
      %p91 = scmp.eq.s32.totalorder %s22, 3
      %p92 = por %p90, %p91
      %p93 = scmp.ne.s32.totalorder %s82, %s83
      %p94 = scmp.eq.s32.totalorder %s22, 0
      %p95 = por %p93, %p94
      %p96 = scmp.ne.s32.totalorder %s82, %s83
      %p97 = scmp.eq.s32.totalorder %s23, 3
      %p98 = por %p96, %p97
      %p100 = scmp.ne.s32.totalorder %s83, %s99
      %p101 = scmp.eq.s32.totalorder %s23, 0
      %p102 = por %p100, %p101
      %p103 = scmp.le.s32.totalorder 1, %s17
      %p104 = scmp.lt.s32.totalorder %s17, 5
      %p105 = pnand %p103, %p104
      %p106 = pneg %p105
      // Predicated region
      $region9: #{tpu_custom_call.1} parent=5 // pred_check
        _
      $region10: #{tpu_custom_call.1} parent=5 // pred_check_branch
        %108 = sbr.rel (%p105) target = $region12
      $region11: #{tpu_custom_call.1} parent=5 // pred_region
        %s109 = ssub.s32 %s17, 1
      $region12: #{tpu_custom_call.1} parent=5 // pred_fallthru
        _
      %p110 = scmp.lt.s32.totalorder %s17, 4
      // Predicated region
      $region13: #{tpu_custom_call.1} parent=5 // pred_check
        %p111 = pneg %p110
      $region14: #{tpu_custom_call.1} parent=5 // pred_check_branch
        %113 = sbr.rel (%p111) target = $region16
      $region15: #{tpu_custom_call.1} parent=5 // pred_region
        // Predicated region
        $region17: #{tpu_custom_call.1} parent=15 // pred_check
          %p114 = pneg %p37
        $region18: #{tpu_custom_call.1} parent=15 // pred_check_branch
          %116 = sbr.rel (%p114) target = $region20
        $region19: #{tpu_custom_call.1} parent=15 // pred_region
          %s117 = sand.u32 %s27, 1
          %s118 = scalar_lea.sflag [#allocation3], %s117
          %s119 = sand.u32 %s27, 1
          %s120 = smul.addr %s119, 320
          %s121 = scalar_lea.vmem [#allocation2], %s120
          %s122 = smul.u32 10, %s17
          %s123 = ssub.s32 38, %s122
          %p124 = scmp.lt.s32.totalorder %s123, 10
          %s125 = scalar_select %p124, %s123, 10
          %s126 = smul.u32 8, %s125
          %s127 = smul.u32 %s126, 4
          %s128 = ssub.s32 320, %s127
          %s129 = sshll.u32 %s128, 4
          %130 = vsyncadd %s118, %s129
          %p131 = scmp.ne.s32.totalorder 0, %s127
          %s132 = smul.addr %s122, 4
          %s133 = smul.addr %s132, 8
          %s134 = scalar_lea.hbm %s0, %s133
          %s135 = smul.u32 32, %s125
          %s136 = sshll.u32 %s134, 4
          %s137 = int_to_ptr.hbm [resolvable:$true] %s136
          %s138 = sshll.u32 %s121, 4
          %s139 = int_to_ptr.vmem [resolvable:$true] %s138
          %s140 = sshll.u32 %s135, 4
          %144 = dma.hbm_to_vmem [thread:$0]  (%p131), %s137, %s140, %s139, %s118, 512, 512, 32
        $region20: #{tpu_custom_call.1} parent=15 // pred_fallthru
          _
        // Predicated region
        $region21: #{tpu_custom_call.1} parent=15 // pred_check
          %p145 = pneg %p63
        $region22: #{tpu_custom_call.1} parent=15 // pred_check_branch
          %147 = sbr.rel (%p145) target = $region24
        $region23: #{tpu_custom_call.1} parent=15 // pred_region
          %s148 = sand.u32 %s53, 1
          %s149 = scalar_lea.sflag [#allocation6], %s148
          %s150 = sand.u32 %s53, 1
          %s151 = smul.addr %s150, 320
          %s152 = scalar_lea.vmem [#allocation5], %s151
          %s153 = smul.u32 10, %s17
          %s154 = ssub.s32 38, %s153
          %p155 = scmp.lt.s32.totalorder %s154, 10
          %s156 = scalar_select %p155, %s154, 10
          %s157 = smul.u32 8, %s156
          %s158 = smul.u32 %s157, 4
          %s159 = ssub.s32 320, %s158
          %s160 = sshll.u32 %s159, 4
          %161 = vsyncadd %s149, %s160
          %p162 = scmp.ne.s32.totalorder 0, %s158
          %s163 = smul.addr %s153, 4
          %s164 = smul.addr %s163, 8
          %s165 = scalar_lea.hbm %s1, %s164
          %s166 = smul.u32 32, %s156
          %s167 = sshll.u32 %s165, 4
          %s168 = int_to_ptr.hbm [resolvable:$true] %s167
          %s169 = sshll.u32 %s152, 4
          %s170 = int_to_ptr.vmem [resolvable:$true] %s169
          %s171 = sshll.u32 %s166, 4
          %175 = dma.hbm_to_vmem [thread:$0]  (%p162), %s168, %s171, %s170, %s149, 512, 512, 32
        $region24: #{tpu_custom_call.1} parent=15 // pred_fallthru
          _
      $region16: #{tpu_custom_call.1} parent=5 // pred_fallthru
        _
      %p176 = scmp.le.s32.totalorder 1, %s17
      %p177 = scmp.lt.s32.totalorder %s17, 5
      %p178 = pnand %p176, %p177
      %p179 = pneg %p178
      // Predicated region
      $region25: #{tpu_custom_call.1} parent=5 // pred_check
        _
      $region26: #{tpu_custom_call.1} parent=5 // pred_check_branch
        %181 = sbr.rel (%p178) target = $region28
      $region27: #{tpu_custom_call.1} parent=5 // pred_region
        %s182 = ssub.s32 %s17, 1
        %s183 = sand.u32 %s30, 1
        %s184 = scalar_lea.sflag [#allocation3], %s183
        %s185 = sand.u32 %s30, 1
        %s186 = smul.addr %s185, 320
        %s187 = scalar_lea.vmem [#allocation2], %s186
        // Predicated region
        $region29: #{tpu_custom_call.1} parent=27 // pred_check
          %p188 = pneg %p43
        $region30: #{tpu_custom_call.1} parent=27 // pred_check_branch
          %190 = sbr.rel (%p188) target = $region32
        $region31: #{tpu_custom_call.1} parent=27 // pred_region
          %192 = dma.done %s184, 5120
        $region32: #{tpu_custom_call.1} parent=27 // pred_fallthru
          _
        %s193 = sand.u32 %s56, 1
        %s194 = scalar_lea.sflag [#allocation6], %s193
        %s195 = sand.u32 %s56, 1
        %s196 = smul.addr %s195, 320
        %s197 = scalar_lea.vmem [#allocation5], %s196
        // Predicated region
        $region33: #{tpu_custom_call.1} parent=27 // pred_check
          %p198 = pneg %p69
        $region34: #{tpu_custom_call.1} parent=27 // pred_check_branch
          %200 = sbr.rel (%p198) target = $region36
        $region35: #{tpu_custom_call.1} parent=27 // pred_region
          %202 = dma.done %s194, 5120
        $region36: #{tpu_custom_call.1} parent=27 // pred_fallthru
          _
        %s203 = sand.u32 %s30, 1
        %s204 = scalar_lea.sflag [#allocation3], %s203
        %s205 = sand.u32 %s30, 1
        %s206 = smul.addr %s205, 320
        %s207 = scalar_lea.vmem [#allocation2], %s206
        %p208 = pneg %p43
        %p209 = pneg %p40
        %s210 = sand.u32 %s56, 1
        %s211 = scalar_lea.sflag [#allocation6], %s210
        %s212 = sand.u32 %s56, 1
        %s213 = smul.addr %s212, 320
        %s214 = scalar_lea.vmem [#allocation5], %s213
        %p215 = pneg %p69
        %p216 = pneg %p66
        %p217 = pneg %p95
        %p218 = pneg %p92
        %s219 = sand.u32 %s82, 1
        %s220 = scalar_lea.sflag [#allocation4], %s219
        %s221 = sand.u32 %s82, 1
        %s222 = smul.addr %s221, 320
        %s223 = scalar_lea.vmem [#allocation7], %s222
        %s224 = smul.u32 10, %s22
        %s225 = ssub.s32 38, %s224
        %p226 = scmp.lt.s32.totalorder %s225, 10
        %s227 = scalar_select %p226, %s225, 10
        %s228 = smul.u32 8, %s227
        %s229 = smul.u32 %s228, 4
        %s230 = smul.u32 10, %s22
        %s231 = ssub.s32 38, %s230
        %p232 = scmp.lt.s32.totalorder %s231, 10
        %s233 = scalar_select %p232, %s231, 10
        %s234 = smul.u32 8, %s233
        %s235 = smul.u32 %s234, 4
        %s236 = smul.u32 10, %s22
        %s237 = ssub.s32 38, %s236
        %p238 = scmp.lt.s32.totalorder %s237, 10
        %s239 = scalar_select %p238, %s237, 10
        %s240 = smul.u32 8, %s239
        %s241 = smul.u32 %s240, 4
        %v242 = vld [vmem:[%s187] sm:$0xff]
        %v243 = vld [vmem:[%s187 + $0x8] sm:$0xff]
        %v244 = vld [vmem:[%s187 + $0x10] sm:$0xff]
        %v245 = vld [vmem:[%s187 + $0x18] sm:$0xff]
        %v246 = vld [vmem:[%s187 + $0x20] sm:$0xff]
        %v247 = vld [vmem:[%s187 + $0x28] sm:$0xff]
        %v248 = vld [vmem:[%s187 + $0x30] sm:$0xff]
        %v249 = vld [vmem:[%s187 + $0x38] sm:$0xff]
        %v250 = vld [vmem:[%s187 + $0x40] sm:$0xff]
        %v251 = vld [vmem:[%s187 + $0x48] sm:$0xff]
        %v252 = vld [vmem:[%s187 + $0x50] sm:$0xff]
        %v253 = vld [vmem:[%s187 + $0x58] sm:$0xff]
        %v254 = vld [vmem:[%s187 + $0x60] sm:$0xff]
        %v255 = vld [vmem:[%s187 + $0x68] sm:$0xff]
        %v256 = vld [vmem:[%s187 + $0x70] sm:$0xff]
        %v257 = vld [vmem:[%s187 + $0x78] sm:$0xff]
        %v258 = vld [vmem:[%s187 + $0x80] sm:$0xff]
        %v259 = vld [vmem:[%s187 + $0x88] sm:$0xff]
        %v260 = vld [vmem:[%s187 + $0x90] sm:$0xff]
        %v261 = vld [vmem:[%s187 + $0x98] sm:$0xff]
        %v262 = vld [vmem:[%s187 + $0xa0] sm:$0xff]
        %v263 = vld [vmem:[%s187 + $0xa8] sm:$0xff]
        %v264 = vld [vmem:[%s187 + $0xb0] sm:$0xff]
        %v265 = vld [vmem:[%s187 + $0xb8] sm:$0xff]
        %v266 = vld [vmem:[%s187 + $0xc0] sm:$0xff]
        %v267 = vld [vmem:[%s187 + $0xc8] sm:$0xff]
        %v268 = vld [vmem:[%s187 + $0xd0] sm:$0xff]
        %v269 = vld [vmem:[%s187 + $0xd8] sm:$0xff]
        %v270 = vld [vmem:[%s187 + $0xe0] sm:$0xff]
        %v271 = vld [vmem:[%s187 + $0xe8] sm:$0xff]
        %v272 = vld [vmem:[%s187 + $0xf0] sm:$0xff]
        %v273 = vld [vmem:[%s187 + $0xf8] sm:$0xff]
        %v274 = vld [vmem:[%s187 + $0x100] sm:$0xff]
        %v275 = vld [vmem:[%s187 + $0x108] sm:$0xff]
        %v276 = vld [vmem:[%s187 + $0x110] sm:$0xff]
        %v277 = vld [vmem:[%s187 + $0x118] sm:$0xff]
        %v278 = vld [vmem:[%s187 + $0x120] sm:$0xff]
        %v279 = vld [vmem:[%s187 + $0x128] sm:$0xff]
        %v280 = vld [vmem:[%s187 + $0x130] sm:$0xff]
        %v281 = vld [vmem:[%s187 + $0x138] sm:$0xff]
        %v282 = vld [vmem:[%s197] sm:$0xff]
        %v283 = vld [vmem:[%s197 + $0x8] sm:$0xff]
        %v284 = vld [vmem:[%s197 + $0x10] sm:$0xff]
        %v285 = vld [vmem:[%s197 + $0x18] sm:$0xff]
        %v286 = vld [vmem:[%s197 + $0x20] sm:$0xff]
        %v287 = vld [vmem:[%s197 + $0x28] sm:$0xff]
        %v288 = vld [vmem:[%s197 + $0x30] sm:$0xff]
        %v289 = vld [vmem:[%s197 + $0x38] sm:$0xff]
        %v290 = vld [vmem:[%s197 + $0x40] sm:$0xff]
        %v291 = vld [vmem:[%s197 + $0x48] sm:$0xff]
        %v292 = vld [vmem:[%s197 + $0x50] sm:$0xff]
        %v293 = vld [vmem:[%s197 + $0x58] sm:$0xff]
        %v294 = vld [vmem:[%s197 + $0x60] sm:$0xff]
        %v295 = vld [vmem:[%s197 + $0x68] sm:$0xff]
        %v296 = vld [vmem:[%s197 + $0x70] sm:$0xff]
        %v297 = vld [vmem:[%s197 + $0x78] sm:$0xff]
        %v298 = vld [vmem:[%s197 + $0x80] sm:$0xff]
        %v299 = vld [vmem:[%s197 + $0x88] sm:$0xff]
        %v300 = vld [vmem:[%s197 + $0x90] sm:$0xff]
        %v301 = vld [vmem:[%s197 + $0x98] sm:$0xff]
        %v302 = vld [vmem:[%s197 + $0xa0] sm:$0xff]
        %v303 = vld [vmem:[%s197 + $0xa8] sm:$0xff]
        %v304 = vld [vmem:[%s197 + $0xb0] sm:$0xff]
        %v305 = vld [vmem:[%s197 + $0xb8] sm:$0xff]
        %v306 = vld [vmem:[%s197 + $0xc0] sm:$0xff]
        %v307 = vld [vmem:[%s197 + $0xc8] sm:$0xff]
        %v308 = vld [vmem:[%s197 + $0xd0] sm:$0xff]
        %v309 = vld [vmem:[%s197 + $0xd8] sm:$0xff]
        %v310 = vld [vmem:[%s197 + $0xe0] sm:$0xff]
        %v311 = vld [vmem:[%s197 + $0xe8] sm:$0xff]
        %v312 = vld [vmem:[%s197 + $0xf0] sm:$0xff]
        %v313 = vld [vmem:[%s197 + $0xf8] sm:$0xff]
        %v314 = vld [vmem:[%s197 + $0x100] sm:$0xff]
        %v315 = vld [vmem:[%s197 + $0x108] sm:$0xff]
        %v316 = vld [vmem:[%s197 + $0x110] sm:$0xff]
        %v317 = vld [vmem:[%s197 + $0x118] sm:$0xff]
        %v318 = vld [vmem:[%s197 + $0x120] sm:$0xff]
        %v319 = vld [vmem:[%s197 + $0x128] sm:$0xff]
        %v320 = vld [vmem:[%s197 + $0x130] sm:$0xff]
        %v321 = vld [vmem:[%s197 + $0x138] sm:$0xff]
        %v322 = vsub.f32 2.0, %v282
        %v323 = vsub.f32 2.0, %v283
        %v324 = vsub.f32 2.0, %v284
        %v325 = vsub.f32 2.0, %v285
        %v326 = vsub.f32 2.0, %v286
        %v327 = vsub.f32 2.0, %v287
        %v328 = vsub.f32 2.0, %v288
        %v329 = vsub.f32 2.0, %v289
        %v330 = vsub.f32 2.0, %v290
        %v331 = vsub.f32 2.0, %v291
        %v332 = vsub.f32 2.0, %v292
        %v333 = vsub.f32 2.0, %v293
        %v334 = vsub.f32 2.0, %v294
        %v335 = vsub.f32 2.0, %v295
        %v336 = vsub.f32 2.0, %v296
        %v337 = vsub.f32 2.0, %v297
        %v338 = vsub.f32 2.0, %v298
        %v339 = vsub.f32 2.0, %v299
        %v340 = vsub.f32 2.0, %v300
        %v341 = vsub.f32 2.0, %v301
        %v342 = vsub.f32 2.0, %v302
        %v343 = vsub.f32 2.0, %v303
        %v344 = vsub.f32 2.0, %v304
        %v345 = vsub.f32 2.0, %v305
        %v346 = vsub.f32 2.0, %v306
        %v347 = vsub.f32 2.0, %v307
        %v348 = vsub.f32 2.0, %v308
        %v349 = vsub.f32 2.0, %v309
        %v350 = vsub.f32 2.0, %v310
        %v351 = vsub.f32 2.0, %v311
        %v352 = vsub.f32 2.0, %v312
        %v353 = vsub.f32 2.0, %v313
        %v354 = vsub.f32 2.0, %v314
        %v355 = vsub.f32 2.0, %v315
        %v356 = vsub.f32 2.0, %v316
        %v357 = vsub.f32 2.0, %v317
        %v358 = vsub.f32 2.0, %v318
        %v359 = vsub.f32 2.0, %v319
        %v360 = vsub.f32 2.0, %v320
        %v361 = vsub.f32 2.0, %v321
        %v362 = vmax.f32 %v322, 0.0
        %v363 = vmax.f32 %v323, 0.0
        %v364 = vmax.f32 %v324, 0.0
        %v365 = vmax.f32 %v325, 0.0
        %v366 = vmax.f32 %v326, 0.0
        %v367 = vmax.f32 %v327, 0.0
        %v368 = vmax.f32 %v328, 0.0
        %v369 = vmax.f32 %v329, 0.0
        %v370 = vmax.f32 %v330, 0.0
        %v371 = vmax.f32 %v331, 0.0
        %v372 = vmax.f32 %v332, 0.0
        %v373 = vmax.f32 %v333, 0.0
        %v374 = vmax.f32 %v334, 0.0
        %v375 = vmax.f32 %v335, 0.0
        %v376 = vmax.f32 %v336, 0.0
        %v377 = vmax.f32 %v337, 0.0
        %v378 = vmax.f32 %v338, 0.0
        %v379 = vmax.f32 %v339, 0.0
        %v380 = vmax.f32 %v340, 0.0
        %v381 = vmax.f32 %v341, 0.0
        %v382 = vmax.f32 %v342, 0.0
        %v383 = vmax.f32 %v343, 0.0
        %v384 = vmax.f32 %v344, 0.0
        %v385 = vmax.f32 %v345, 0.0
        %v386 = vmax.f32 %v346, 0.0
        %v387 = vmax.f32 %v347, 0.0
        %v388 = vmax.f32 %v348, 0.0
        %v389 = vmax.f32 %v349, 0.0
        %v390 = vmax.f32 %v350, 0.0
        %v391 = vmax.f32 %v351, 0.0
        %v392 = vmax.f32 %v352, 0.0
        %v393 = vmax.f32 %v353, 0.0
        %v394 = vmax.f32 %v354, 0.0
        %v395 = vmax.f32 %v355, 0.0
        %v396 = vmax.f32 %v356, 0.0
        %v397 = vmax.f32 %v357, 0.0
        %v398 = vmax.f32 %v358, 0.0
        %v399 = vmax.f32 %v359, 0.0
        %v400 = vmax.f32 %v360, 0.0
        %v401 = vmax.f32 %v361, 0.0
        %v402 = vmul.f32 %v362, %v362
        %v403 = vmul.f32 %v363, %v363
        %v404 = vmul.f32 %v364, %v364
        %v405 = vmul.f32 %v365, %v365
        %v406 = vmul.f32 %v366, %v366
        %v407 = vmul.f32 %v367, %v367
        %v408 = vmul.f32 %v368, %v368
        %v409 = vmul.f32 %v369, %v369
        %v410 = vmul.f32 %v370, %v370
        %v411 = vmul.f32 %v371, %v371
        %v412 = vmul.f32 %v372, %v372
        %v413 = vmul.f32 %v373, %v373
        %v414 = vmul.f32 %v374, %v374
        %v415 = vmul.f32 %v375, %v375
        %v416 = vmul.f32 %v376, %v376
        %v417 = vmul.f32 %v377, %v377
        %v418 = vmul.f32 %v378, %v378
        %v419 = vmul.f32 %v379, %v379
        %v420 = vmul.f32 %v380, %v380
        %v421 = vmul.f32 %v381, %v381
        %v422 = vmul.f32 %v382, %v382
        %v423 = vmul.f32 %v383, %v383
        %v424 = vmul.f32 %v384, %v384
        %v425 = vmul.f32 %v385, %v385
        %v426 = vmul.f32 %v386, %v386
        %v427 = vmul.f32 %v387, %v387
        %v428 = vmul.f32 %v388, %v388
        %v429 = vmul.f32 %v389, %v389
        %v430 = vmul.f32 %v390, %v390
        %v431 = vmul.f32 %v391, %v391
        %v432 = vmul.f32 %v392, %v392
        %v433 = vmul.f32 %v393, %v393
        %v434 = vmul.f32 %v394, %v394
        %v435 = vmul.f32 %v395, %v395
        %v436 = vmul.f32 %v396, %v396
        %v437 = vmul.f32 %v397, %v397
        %v438 = vmul.f32 %v398, %v398
        %v439 = vmul.f32 %v399, %v399
        %v440 = vmul.f32 %v400, %v400
        %v441 = vmul.f32 %v401, %v401
        %v442 = vmul.f32 %v402, 0.5
        %v443 = vmul.f32 %v403, 0.5
        %v444 = vmul.f32 %v404, 0.5
        %v445 = vmul.f32 %v405, 0.5
        %v446 = vmul.f32 %v406, 0.5
        %v447 = vmul.f32 %v407, 0.5
        %v448 = vmul.f32 %v408, 0.5
        %v449 = vmul.f32 %v409, 0.5
        %v450 = vmul.f32 %v410, 0.5
        %v451 = vmul.f32 %v411, 0.5
        %v452 = vmul.f32 %v412, 0.5
        %v453 = vmul.f32 %v413, 0.5
        %v454 = vmul.f32 %v414, 0.5
        %v455 = vmul.f32 %v415, 0.5
        %v456 = vmul.f32 %v416, 0.5
        %v457 = vmul.f32 %v417, 0.5
        %v458 = vmul.f32 %v418, 0.5
        %v459 = vmul.f32 %v419, 0.5
        %v460 = vmul.f32 %v420, 0.5
        %v461 = vmul.f32 %v421, 0.5
        %v462 = vmul.f32 %v422, 0.5
        %v463 = vmul.f32 %v423, 0.5
        %v464 = vmul.f32 %v424, 0.5
        %v465 = vmul.f32 %v425, 0.5
        %v466 = vmul.f32 %v426, 0.5
        %v467 = vmul.f32 %v427, 0.5
        %v468 = vmul.f32 %v428, 0.5
        %v469 = vmul.f32 %v429, 0.5
        %v470 = vmul.f32 %v430, 0.5
        %v471 = vmul.f32 %v431, 0.5
        %v472 = vmul.f32 %v432, 0.5
        %v473 = vmul.f32 %v433, 0.5
        %v474 = vmul.f32 %v434, 0.5
        %v475 = vmul.f32 %v435, 0.5
        %v476 = vmul.f32 %v436, 0.5
        %v477 = vmul.f32 %v437, 0.5
        %v478 = vmul.f32 %v438, 0.5
        %v479 = vmul.f32 %v439, 0.5
        %v480 = vmul.f32 %v440, 0.5
        %v481 = vmul.f32 %v441, 0.5
        %v482 = vmul.f32 %v282, %v282
        %v483 = vmul.f32 %v283, %v283
        %v484 = vmul.f32 %v284, %v284
        %v485 = vmul.f32 %v285, %v285
        %v486 = vmul.f32 %v286, %v286
        %v487 = vmul.f32 %v287, %v287
        %v488 = vmul.f32 %v288, %v288
        %v489 = vmul.f32 %v289, %v289
        %v490 = vmul.f32 %v290, %v290
        %v491 = vmul.f32 %v291, %v291
        %v492 = vmul.f32 %v292, %v292
        %v493 = vmul.f32 %v293, %v293
        %v494 = vmul.f32 %v294, %v294
        %v495 = vmul.f32 %v295, %v295
        %v496 = vmul.f32 %v296, %v296
        %v497 = vmul.f32 %v297, %v297
        %v498 = vmul.f32 %v298, %v298
        %v499 = vmul.f32 %v299, %v299
        %v500 = vmul.f32 %v300, %v300
        %v501 = vmul.f32 %v301, %v301
        %v502 = vmul.f32 %v302, %v302
        %v503 = vmul.f32 %v303, %v303
        %v504 = vmul.f32 %v304, %v304
        %v505 = vmul.f32 %v305, %v305
        %v506 = vmul.f32 %v306, %v306
        %v507 = vmul.f32 %v307, %v307
        %v508 = vmul.f32 %v308, %v308
        %v509 = vmul.f32 %v309, %v309
        %v510 = vmul.f32 %v310, %v310
        %v511 = vmul.f32 %v311, %v311
        %v512 = vmul.f32 %v312, %v312
        %v513 = vmul.f32 %v313, %v313
        %v514 = vmul.f32 %v314, %v314
        %v515 = vmul.f32 %v315, %v315
        %v516 = vmul.f32 %v316, %v316
        %v517 = vmul.f32 %v317, %v317
        %v518 = vmul.f32 %v318, %v318
        %v519 = vmul.f32 %v319, %v319
        %v520 = vmul.f32 %v320, %v320
        %v521 = vmul.f32 %v321, %v321
        %v522 = vmul.f32 %v482, 0.5
        %v523 = vmul.f32 %v483, 0.5
        %v524 = vmul.f32 %v484, 0.5
        %v525 = vmul.f32 %v485, 0.5
        %v526 = vmul.f32 %v486, 0.5
        %v527 = vmul.f32 %v487, 0.5
        %v528 = vmul.f32 %v488, 0.5
        %v529 = vmul.f32 %v489, 0.5
        %v530 = vmul.f32 %v490, 0.5
        %v531 = vmul.f32 %v491, 0.5
        %v532 = vmul.f32 %v492, 0.5
        %v533 = vmul.f32 %v493, 0.5
        %v534 = vmul.f32 %v494, 0.5
        %v535 = vmul.f32 %v495, 0.5
        %v536 = vmul.f32 %v496, 0.5
        %v537 = vmul.f32 %v497, 0.5
        %v538 = vmul.f32 %v498, 0.5
        %v539 = vmul.f32 %v499, 0.5
        %v540 = vmul.f32 %v500, 0.5
        %v541 = vmul.f32 %v501, 0.5
        %v542 = vmul.f32 %v502, 0.5
        %v543 = vmul.f32 %v503, 0.5
        %v544 = vmul.f32 %v504, 0.5
        %v545 = vmul.f32 %v505, 0.5
        %v546 = vmul.f32 %v506, 0.5
        %v547 = vmul.f32 %v507, 0.5
        %v548 = vmul.f32 %v508, 0.5
        %v549 = vmul.f32 %v509, 0.5
        %v550 = vmul.f32 %v510, 0.5
        %v551 = vmul.f32 %v511, 0.5
        %v552 = vmul.f32 %v512, 0.5
        %v553 = vmul.f32 %v513, 0.5
        %v554 = vmul.f32 %v514, 0.5
        %v555 = vmul.f32 %v515, 0.5
        %v556 = vmul.f32 %v516, 0.5
        %v557 = vmul.f32 %v517, 0.5
        %v558 = vmul.f32 %v518, 0.5
        %v559 = vmul.f32 %v519, 0.5
        %v560 = vmul.f32 %v520, 0.5
        %v561 = vmul.f32 %v521, 0.5
        %v562 = vsub.f32 %v522, %v442
        %v563 = vsub.f32 %v523, %v443
        %v564 = vsub.f32 %v524, %v444
        %v565 = vsub.f32 %v525, %v445
        %v566 = vsub.f32 %v526, %v446
        %v567 = vsub.f32 %v527, %v447
        %v568 = vsub.f32 %v528, %v448
        %v569 = vsub.f32 %v529, %v449
        %v570 = vsub.f32 %v530, %v450
        %v571 = vsub.f32 %v531, %v451
        %v572 = vsub.f32 %v532, %v452
        %v573 = vsub.f32 %v533, %v453
        %v574 = vsub.f32 %v534, %v454
        %v575 = vsub.f32 %v535, %v455
        %v576 = vsub.f32 %v536, %v456
        %v577 = vsub.f32 %v537, %v457
        %v578 = vsub.f32 %v538, %v458
        %v579 = vsub.f32 %v539, %v459
        %v580 = vsub.f32 %v540, %v460
        %v581 = vsub.f32 %v541, %v461
        %v582 = vsub.f32 %v542, %v462
        %v583 = vsub.f32 %v543, %v463
        %v584 = vsub.f32 %v544, %v464
        %v585 = vsub.f32 %v545, %v465
        %v586 = vsub.f32 %v546, %v466
        %v587 = vsub.f32 %v547, %v467
        %v588 = vsub.f32 %v548, %v468
        %v589 = vsub.f32 %v549, %v469
        %v590 = vsub.f32 %v550, %v470
        %v591 = vsub.f32 %v551, %v471
        %v592 = vsub.f32 %v552, %v472
        %v593 = vsub.f32 %v553, %v473
        %v594 = vsub.f32 %v554, %v474
        %v595 = vsub.f32 %v555, %v475
        %v596 = vsub.f32 %v556, %v476
        %v597 = vsub.f32 %v557, %v477
        %v598 = vsub.f32 %v558, %v478
        %v599 = vsub.f32 %v559, %v479
        %v600 = vsub.f32 %v560, %v480
        %v601 = vsub.f32 %v561, %v481
        %v602 = vmul.f32 %v242, %v562
        %v603 = vmul.f32 %v243, %v563
        %v604 = vmul.f32 %v244, %v564
        %v605 = vmul.f32 %v245, %v565
        %v606 = vmul.f32 %v246, %v566
        %v607 = vmul.f32 %v247, %v567
        %v608 = vmul.f32 %v248, %v568
        %v609 = vmul.f32 %v249, %v569
        %v610 = vmul.f32 %v250, %v570
        %v611 = vmul.f32 %v251, %v571
        %v612 = vmul.f32 %v252, %v572
        %v613 = vmul.f32 %v253, %v573
        %v614 = vmul.f32 %v254, %v574
        %v615 = vmul.f32 %v255, %v575
        %v616 = vmul.f32 %v256, %v576
        %v617 = vmul.f32 %v257, %v577
        %v618 = vmul.f32 %v258, %v578
        %v619 = vmul.f32 %v259, %v579
        %v620 = vmul.f32 %v260, %v580
        %v621 = vmul.f32 %v261, %v581
        %v622 = vmul.f32 %v262, %v582
        %v623 = vmul.f32 %v263, %v583
        %v624 = vmul.f32 %v264, %v584
        %v625 = vmul.f32 %v265, %v585
        %v626 = vmul.f32 %v266, %v586
        %v627 = vmul.f32 %v267, %v587
        %v628 = vmul.f32 %v268, %v588
        %v629 = vmul.f32 %v269, %v589
        %v630 = vmul.f32 %v270, %v590
        %v631 = vmul.f32 %v271, %v591
        %v632 = vmul.f32 %v272, %v592
        %v633 = vmul.f32 %v273, %v593
        %v634 = vmul.f32 %v274, %v594
        %v635 = vmul.f32 %v275, %v595
        %v636 = vmul.f32 %v276, %v596
        %v637 = vmul.f32 %v277, %v597
        %v638 = vmul.f32 %v278, %v598
        %v639 = vmul.f32 %v279, %v599
        %v640 = vmul.f32 %v280, %v600
        %v641 = vmul.f32 %v281, %v601
        %v642 = vadd.f32 %v602, %v442
        %v643 = vadd.f32 %v603, %v443
        %v644 = vadd.f32 %v604, %v444
        %v645 = vadd.f32 %v605, %v445
        %v646 = vadd.f32 %v606, %v446
        %v647 = vadd.f32 %v607, %v447
        %v648 = vadd.f32 %v608, %v448
        %v649 = vadd.f32 %v609, %v449
        %v650 = vadd.f32 %v610, %v450
        %v651 = vadd.f32 %v611, %v451
        %v652 = vadd.f32 %v612, %v452
        %v653 = vadd.f32 %v613, %v453
        %v654 = vadd.f32 %v614, %v454
        %v655 = vadd.f32 %v615, %v455
        %v656 = vadd.f32 %v616, %v456
        %v657 = vadd.f32 %v617, %v457
        %v658 = vadd.f32 %v618, %v458
        %v659 = vadd.f32 %v619, %v459
        %v660 = vadd.f32 %v620, %v460
        %v661 = vadd.f32 %v621, %v461
        %v662 = vadd.f32 %v622, %v462
        %v663 = vadd.f32 %v623, %v463
        %v664 = vadd.f32 %v624, %v464
        %v665 = vadd.f32 %v625, %v465
        %v666 = vadd.f32 %v626, %v466
        %v667 = vadd.f32 %v627, %v467
        %v668 = vadd.f32 %v628, %v468
        %v669 = vadd.f32 %v629, %v469
        %v670 = vadd.f32 %v630, %v470
        %v671 = vadd.f32 %v631, %v471
        %v672 = vadd.f32 %v632, %v472
        %v673 = vadd.f32 %v633, %v473
        %v674 = vadd.f32 %v634, %v474
        %v675 = vadd.f32 %v635, %v475
        %v676 = vadd.f32 %v636, %v476
        %v677 = vadd.f32 %v637, %v477
        %v678 = vadd.f32 %v638, %v478
        %v679 = vadd.f32 %v639, %v479
        %v680 = vadd.f32 %v640, %v480
        %v681 = vadd.f32 %v641, %v481
        %682 = vst [vmem:[%s223] sm:$0xff] %v642
        %683 = vst [vmem:[%s223 + $0x8] sm:$0xff] %v643
        %684 = vst [vmem:[%s223 + $0x10] sm:$0xff] %v644
        %vm685 = vcmask 949248
        %686 = vst.msk [vmem:[%s223 + $0x18] sm:$0xff] %vm685, %v645
        %687 = vst [vmem:[%s223 + $0x20] sm:$0xff] %v646
        %688 = vst [vmem:[%s223 + $0x28] sm:$0xff] %v647
        %689 = vst [vmem:[%s223 + $0x30] sm:$0xff] %v648
        %690 = vst.msk [vmem:[%s223 + $0x38] sm:$0xff] %vm685, %v649
        %691 = vst [vmem:[%s223 + $0x40] sm:$0xff] %v650
        %692 = vst [vmem:[%s223 + $0x48] sm:$0xff] %v651
        %693 = vst [vmem:[%s223 + $0x50] sm:$0xff] %v652
        %694 = vst.msk [vmem:[%s223 + $0x58] sm:$0xff] %vm685, %v653
        %695 = vst [vmem:[%s223 + $0x60] sm:$0xff] %v654
        %696 = vst [vmem:[%s223 + $0x68] sm:$0xff] %v655
        %697 = vst [vmem:[%s223 + $0x70] sm:$0xff] %v656
        %698 = vst.msk [vmem:[%s223 + $0x78] sm:$0xff] %vm685, %v657
        %699 = vst [vmem:[%s223 + $0x80] sm:$0xff] %v658
        %700 = vst [vmem:[%s223 + $0x88] sm:$0xff] %v659
        %701 = vst [vmem:[%s223 + $0x90] sm:$0xff] %v660
        %702 = vst.msk [vmem:[%s223 + $0x98] sm:$0xff] %vm685, %v661
        %703 = vst [vmem:[%s223 + $0xa0] sm:$0xff] %v662
        %704 = vst [vmem:[%s223 + $0xa8] sm:$0xff] %v663
        %705 = vst [vmem:[%s223 + $0xb0] sm:$0xff] %v664
        %706 = vst.msk [vmem:[%s223 + $0xb8] sm:$0xff] %vm685, %v665
        %707 = vst [vmem:[%s223 + $0xc0] sm:$0xff] %v666
        %708 = vst [vmem:[%s223 + $0xc8] sm:$0xff] %v667
        %709 = vst [vmem:[%s223 + $0xd0] sm:$0xff] %v668
        %710 = vst.msk [vmem:[%s223 + $0xd8] sm:$0xff] %vm685, %v669
        %711 = vst [vmem:[%s223 + $0xe0] sm:$0xff] %v670
        %712 = vst [vmem:[%s223 + $0xe8] sm:$0xff] %v671
        %713 = vst [vmem:[%s223 + $0xf0] sm:$0xff] %v672
        %714 = vst.msk [vmem:[%s223 + $0xf8] sm:$0xff] %vm685, %v673
        %715 = vst [vmem:[%s223 + $0x100] sm:$0xff] %v674
        %716 = vst [vmem:[%s223 + $0x108] sm:$0xff] %v675
        %717 = vst [vmem:[%s223 + $0x110] sm:$0xff] %v676
        %718 = vst.msk [vmem:[%s223 + $0x118] sm:$0xff] %vm685, %v677
        %719 = vst [vmem:[%s223 + $0x120] sm:$0xff] %v678
        %720 = vst [vmem:[%s223 + $0x128] sm:$0xff] %v679
        %721 = vst [vmem:[%s223 + $0x130] sm:$0xff] %v680
        %722 = vst.msk [vmem:[%s223 + $0x138] sm:$0xff] %vm685, %v681
        %s723 = sand.u32 %s82, 1
        %s724 = scalar_lea.sflag [#allocation4], %s723
        %s725 = sand.u32 %s82, 1
        %s726 = smul.addr %s725, 320
        %s727 = scalar_lea.vmem [#allocation7], %s726
        // Predicated region
        $region37: #{tpu_custom_call.1} parent=27 // pred_check
          %p728 = pneg %p92
        $region38: #{tpu_custom_call.1} parent=27 // pred_check_branch
          %730 = sbr.rel (%p728) target = $region40
        $region39: #{tpu_custom_call.1} parent=27 // pred_region
          %s731 = smul.u32 10, %s22
          %s732 = ssub.s32 38, %s731
          %p733 = scmp.lt.s32.totalorder %s732, 10
          %s734 = scalar_select %p733, %s732, 10
          %s735 = smul.u32 8, %s734
          %s736 = smul.u32 %s735, 4
          %s737 = ssub.s32 320, %s736
          %s738 = sshll.u32 %s737, 4
          %739 = vsyncadd %s724, %s738
          %p740 = scmp.ne.s32.totalorder 0, %s736
          %s741 = smul.addr %s731, 4
          %s742 = smul.addr %s741, 8
          %s743 = scalar_lea.hbm %s2, %s742
          %s744 = smul.u32 32, %s734
          %s745 = sshll.u32 %s727, 4
          %s746 = int_to_ptr.vmem [resolvable:$true] %s745
          %s747 = sshll.u32 %s743, 4
          %s748 = int_to_ptr.hbm [resolvable:$true] %s747
          %s749 = sshll.u32 %s744, 4
          %753 = dma.vmem_to_hbm [thread:$0]  (%p740), %s746, %s749, %s748, %s724, 512, 512, 32
        $region40: #{tpu_custom_call.1} parent=27 // pred_fallthru
          _
      $region28: #{tpu_custom_call.1} parent=5 // pred_fallthru
        _
      %p754 = scmp.le.s32.totalorder 2, %s17
      // Predicated region
      $region41: #{tpu_custom_call.1} parent=5 // pred_check
        %p755 = pneg %p754
      $region42: #{tpu_custom_call.1} parent=5 // pred_check_branch
        %757 = sbr.rel (%p755) target = $region44
      $region43: #{tpu_custom_call.1} parent=5 // pred_region
        %s758 = ssub.s32 %s17, 2
        // Predicated region
        $region45: #{tpu_custom_call.1} parent=43 // pred_check
          %p759 = pneg %p98
        $region46: #{tpu_custom_call.1} parent=43 // pred_check_branch
          %761 = sbr.rel (%p759) target = $region48
        $region47: #{tpu_custom_call.1} parent=43 // pred_region
          %s762 = sand.u32 %s83, 1
          %s763 = scalar_lea.sflag [#allocation4], %s762
          %s764 = sand.u32 %s83, 1
          %s765 = smul.addr %s764, 320
          %s766 = scalar_lea.vmem [#allocation7], %s765
          %768 = dma.done %s763, 5120
        $region48: #{tpu_custom_call.1} parent=43 // pred_fallthru
          _
      $region44: #{tpu_custom_call.1} parent=5 // pred_fallthru
        _
    $region6: #{tpu_custom_call.1} parent=1 // loop_footer
      %s21 = sadd.s32 1, %s17
    $region7: #{tpu_custom_call.1} parent=1 // loop_footer_branch
      %16 = sbr.rel target = $region3
    $region8: #{tpu_custom_call.1} parent=1 // loop_exit
      _
    %769 = vsyncpa [#allocation3], 1
    %s770 = scalar_lea.sflag [#allocation3], 1
    %771 = vsyncpa %s770, 1
    %772 = vsyncpa [#allocation6], 1
    %s773 = scalar_lea.sflag [#allocation6], 1
    %774 = vsyncpa %s773, 1
    %775 = vsyncpa [#allocation4], 1
    %s776 = scalar_lea.sflag [#allocation4], 1
    %777 = vsyncpa %s776, 1

</llo_original>
